<compile_context>
chip_gen: v5e
topology: v5e:2x2
jax: 0.10.0
libtpu: 0.0.40
codegen_flags: <defaults>
</compile_context>

<pallas_src>
import functools

import jax
import jax.numpy as jnp
from jax.experimental import pallas as pl
from jax.experimental.pallas import tpu as pltpu


# ----------------------------------------------------------------------------
# VMEM-aware tile selection
# ----------------------------------------------------------------------------
def _vmem_capacity_bytes():
    try:
        info = pltpu.get_tpu_info()
        cap = getattr(info, "vmem_capacity_bytes", None)
        if cap:
            return int(cap)
    except Exception:
        pass
    return 64 << 20  # conservative fallback (v7x per-core VMEM)


def _vmem_limit_bytes():
    cap = _vmem_capacity_bytes()
    # leave headroom above the double-buffered tiles; raise past the
    # 16/32 MiB scoped defaults but never request more than is physical.
    return int(min(max(cap - (16 << 20), 32 << 20), 100 << 20))


def _round_up(v, m):
    return -(-v // m) * m


def _pick_hw_tile(hw, c, b):
    """Lane-axis (H*W) tile for the channels_first kernel."""
    if hw <= 128:
        return hw
    cap = _vmem_capacity_bytes()
    # Budget for the (c, t) slabs: 2x double-buffered input, 2x output,
    # plus f32 working copies inside the kernel body.
    budget = min(cap // 4, 32 << 20)
    c_sub = _round_up(c, 8)                       # sublane padding
    t = budget // (8 * c_sub * 4)
    # Megacore sharding: if the batch axis alone does not give enough
    # parallel grid steps, split H*W so the total step count is >= 8.
    if b < 8:
        want_steps = -(-8 // max(b, 1))
        t = min(t, _round_up(-(-hw // want_steps), 128))
    t = max(128, (t // 128) * 128)                # lane-dense multiple of 128
    if t >= hw:
        return hw                                 # full extent (always legal)
    return t


def _pick_row_tile(n, c):
    """Row (sublane-axis) tile for the channels_last kernel (lane axis = C)."""
    cap = _vmem_capacity_bytes()
    budget = min(cap // 4, 32 << 20)
    c_lane = _round_up(c, 128)                    # lane padding
    tm = budget // (8 * c_lane * 4)
    tm = max(8, (tm // 8) * 8)
    tm = min(tm, 4096)
    if tm >= n:
        return n                                  # full extent (always legal)
    return tm


# ----------------------------------------------------------------------------
# Kernels
# ----------------------------------------------------------------------------
def _ln_channels_first_kernel(x_ref, w_ref, b_ref, o_ref, *, eps):
    # x_ref: (1, C, T_HW)   w_ref/b_ref: (C, 1)   o_ref: (1, C, T_HW)
    x = x_ref[...].astype(jnp.float32)
    mean = jnp.mean(x, axis=1, keepdims=True)             # (1, 1, T)
    xc = x - mean
    var = jnp.mean(xc * xc, axis=1, keepdims=True)         # biased, matches .pow(2).mean
    inv = jax.lax.rsqrt(var + eps)
    w = w_ref[...].astype(jnp.float32)[None]                # (1, C, 1)
    b = b_ref[...].astype(jnp.float32)[None]                # (1, C, 1)
    o_ref[...] = (xc * inv * w + b).astype(o_ref.dtype)


def _ln_channels_last_kernel(x_ref, w_ref, b_ref, o_ref, *, eps):
    # x_ref: (TM, C)   w_ref/b_ref: (1, C)   o_ref: (TM, C)
    x = x_ref[...].astype(jnp.float32)
    mean = jnp.mean(x, axis=-1, keepdims=True)
    xc = x - mean
    var = jnp.mean(xc * xc, axis=-1, keepdims=True)
    inv = jax.lax.rsqrt(var + eps)
    y = xc * inv * w_ref[...].astype(jnp.float32) + b_ref[...].astype(jnp.float32)
    o_ref[...] = y.astype(o_ref.dtype)


# ----------------------------------------------------------------------------
# Wrappers
# ----------------------------------------------------------------------------
def _layernorm_channels_first(x, weight, bias, eps):
    b, c, h, w = x.shape
    hw = h * w
    x3 = x.reshape(b, c, hw)                  # free reshape, stays in NCHW layout
    t = _pick_hw_tile(hw, c, b)
    grid = (b, pl.cdiv(hw, t))

    out = pl.pallas_call(
        functools.partial(_ln_channels_first_kernel, eps=eps),
        out_shape=jax.ShapeDtypeStruct((b, c, hw), x.dtype),
        grid=grid,
        in_specs=[
            pl.BlockSpec((1, c, t), lambda i, j: (i, 0, j)),
            pl.BlockSpec((c, 1), lambda i, j: (0, 0)),      # resident across grid
            pl.BlockSpec((c, 1), lambda i, j: (0, 0)),
        ],
        out_specs=pl.BlockSpec((1, c, t), lambda i, j: (i, 0, j)),
        compiler_params=pltpu.CompilerParams(
            dimension_semantics=("parallel", "parallel"),
            vmem_limit_bytes=_vmem_limit_bytes(),
        ),
    )(x3, weight.reshape(c, 1), bias.reshape(c, 1))
    return out.reshape(b, c, h, w)


def _layernorm_channels_last(x, weight, bias, eps):
    c = x.shape[-1]
    lead = x.shape[:-1]
    n = 1
    for d in lead:
        n *= d
    x2 = x.reshape(n, c)
    tm = _pick_row_tile(n, c)
    grid = (pl.cdiv(n, tm),)

    out = pl.pallas_call(
        functools.partial(_ln_channels_last_kernel, eps=eps),
        out_shape=jax.ShapeDtypeStruct((n, c), x.dtype),
        grid=grid,
        in_specs=[
            pl.BlockSpec((tm, c), lambda i: (i, 0)),
            pl.BlockSpec((1, c), lambda i: (0, 0)),          # resident across grid
            pl.BlockSpec((1, c), lambda i: (0, 0)),
        ],
        out_specs=pl.BlockSpec((tm, c), lambda i: (i, 0)),
        compiler_params=pltpu.CompilerParams(
            dimension_semantics=("parallel",),
            vmem_limit_bytes=_vmem_limit_bytes(),
        ),
    )(x2, weight.reshape(1, c), bias.reshape(1, c))
    return out.reshape(*lead, c)


def layernorm(x, weight, bias, eps=1e-6, data_format="channels_first"):
    """Matches the PyTorch LayerNorm module's forward.

    channels_first: x is (B, C, H, W), normalize over C per (b, h, w).
    channels_last:  x is (..., C), normalize over trailing C (F.layer_norm).
    """
    if data_format == "channels_first":
        return _layernorm_channels_first(x, weight, bias, eps)
    elif data_format == "channels_last":
        return _layernorm_channels_last(x, weight, bias, eps)
    else:
        raise NotImplementedError


# ----------------------------------------------------------------------------
# Pure-JAX references (replicas of the PyTorch forward)
# ----------------------------------------------------------------------------
def _reference_channels_first(x, weight, bias, eps):
    u = jnp.mean(x, axis=1, keepdims=True)
    s = jnp.mean((x - u) ** 2, axis=1, keepdims=True)
    xn = (x - u) / jnp.sqrt(s + eps)
    return weight[None, :, None, None] * xn + bias[None, :, None, None]


def _reference_channels_last(x, weight, bias, eps):
    u = jnp.mean(x, axis=-1, keepdims=True)
    s = jnp.mean((x - u) ** 2, axis=-1, keepdims=True)
    xn = (x - u) / jnp.sqrt(s + eps)
    return weight * xn + bias


if __name__ == "__main__":
    key = jax.random.PRNGKey(0)
    k_x, k_w, k_b = jax.random.split(key, 3)

    B, C, H, W = 2, 4, 16, 16
    x = jax.random.normal(k_x, (B, C, H, W), dtype=jnp.float32)

    # Parameters per nn.Parameter(torch.ones(C)) / torch.zeros(C); perturbed
    # deterministically so the affine part is actually exercised.
    weight = jnp.ones((C,), jnp.float32) + 0.1 * jax.random.normal(k_w, (C,), jnp.float32)
    bias = jnp.zeros((C,), jnp.float32) + 0.1 * jax.random.normal(k_b, (C,), jnp.float32)
    eps = 1e-6

    # channels_first (module default): NCHW, normalize over C.
    y_cf = layernorm(x, weight, bias, eps=eps, data_format="channels_first")
    y_cf = jax.block_until_ready(y_cf)
    y_cf_ref = _reference_channels_first(x, weight, bias, eps)
    assert y_cf.shape == x.shape and y_cf.dtype == x.dtype
    assert jnp.allclose(y_cf, y_cf_ref, atol=1e-5, rtol=1e-5)

    # channels_last: (..., C), normalize over trailing C.
    x_cl = jnp.transpose(x, (0, 2, 3, 1))
    y_cl = layernorm(x_cl, weight, bias, eps=eps, data_format="channels_last")
    y_cl = jax.block_until_ready(y_cl)
    y_cl_ref = _reference_channels_last(x_cl, weight, bias, eps)
    assert y_cl.shape == x_cl.shape and y_cl.dtype == x_cl.dtype
    assert jnp.allclose(y_cl, y_cl_ref, atol=1e-5, rtol=1e-5)

    print("KERNEL_OK")
</pallas_src>

<mosaic_0001>
module attributes {stable_mosaic.version = 11 : i64} {
  func.func @_ln_channels_first_kernel(%arg0: i32, %arg1: i32, %arg2: memref<1x4x128xf32, #tpu.memory_space<vmem>>, %arg3: memref<4x1xf32, #tpu.memory_space<vmem>>, %arg4: memref<4x1xf32, #tpu.memory_space<vmem>>, %arg5: memref<1x4x128xf32, #tpu.memory_space<vmem>>) attributes {dimension_semantics = [#tpu.dimension_semantics<parallel>, #tpu.dimension_semantics<parallel>], iteration_bounds = array<i64: 2, 2>, scalar_prefetch = 0 : i64, scratch_operands = 0 : i64, tpu.core_type = #tpu.core_type<tc>, window_params = [{transform_indices = @transform_0, window_bounds = array<i64: 1, 4, 128>}, {pipeline_mode = #tpu.pipeline_mode<synchronous>, transform_indices = @transform_1, window_bounds = array<i64: 4, 1>}, {pipeline_mode = #tpu.pipeline_mode<synchronous>, transform_indices = @transform_2, window_bounds = array<i64: 4, 1>}, {transform_indices = @transform_3, window_bounds = array<i64: 1, 4, 128>}]} {
    %c0 = arith.constant 0 : index
    %c0_0 = arith.constant 0 : index
    %c0_1 = arith.constant 0 : index
    %0 = vector.load %arg2[%c0, %c0_0, %c0_1] : memref<1x4x128xf32, #tpu.memory_space<vmem>>, vector<1x4x128xf32>
    %cst = arith.constant dense<0.000000e+00> : vector<1x128xf32>
    %1 = vector.multi_reduction <add>, %0, %cst [1] : vector<1x4x128xf32> to vector<1x128xf32>
    %2 = vector.shape_cast %1 : vector<1x128xf32> to vector<1x1x128xf32>
    %cst_2 = arith.constant 4.000000e+00 : f32
    %3 = vector.broadcast %cst_2 : f32 to vector<1x1x128xf32>
    %4 = arith.divf %2, %3 : vector<1x1x128xf32>
    %5 = vector.broadcast %4 : vector<1x1x128xf32> to vector<1x4x128xf32>
    %6 = arith.subf %0, %5 : vector<1x4x128xf32>
    %7 = arith.mulf %6, %6 : vector<1x4x128xf32>
    %cst_3 = arith.constant dense<0.000000e+00> : vector<1x128xf32>
    %8 = vector.multi_reduction <add>, %7, %cst_3 [1] : vector<1x4x128xf32> to vector<1x128xf32>
    %9 = vector.shape_cast %8 : vector<1x128xf32> to vector<1x1x128xf32>
    %cst_4 = arith.constant 4.000000e+00 : f32
    %10 = vector.broadcast %cst_4 : f32 to vector<1x1x128xf32>
    %11 = arith.divf %9, %10 : vector<1x1x128xf32>
    %cst_5 = arith.constant 9.99999997E-7 : f32
    %12 = vector.broadcast %cst_5 : f32 to vector<1x1x128xf32>
    %13 = arith.addf %11, %12 : vector<1x1x128xf32>
    %14 = math.rsqrt %13 : vector<1x1x128xf32>
    %c0_6 = arith.constant 0 : index
    %c0_7 = arith.constant 0 : index
    %15 = vector.load %arg3[%c0_6, %c0_7] : memref<4x1xf32, #tpu.memory_space<vmem>>, vector<4x1xf32>
    %16 = vector.shape_cast %15 : vector<4x1xf32> to vector<1x4x1xf32>
    %c0_8 = arith.constant 0 : index
    %c0_9 = arith.constant 0 : index
    %17 = vector.load %arg4[%c0_8, %c0_9] : memref<4x1xf32, #tpu.memory_space<vmem>>, vector<4x1xf32>
    %18 = vector.shape_cast %17 : vector<4x1xf32> to vector<1x4x1xf32>
    %19 = vector.broadcast %14 : vector<1x1x128xf32> to vector<1x4x128xf32>
    %20 = arith.mulf %6, %19 : vector<1x4x128xf32>
    %21 = vector.broadcast %16 : vector<1x4x1xf32> to vector<1x4x128xf32>
    %22 = arith.mulf %20, %21 : vector<1x4x128xf32>
    %23 = vector.broadcast %18 : vector<1x4x1xf32> to vector<1x4x128xf32>
    %24 = arith.addf %22, %23 : vector<1x4x128xf32>
    %c0_10 = arith.constant 0 : index
    %c0_11 = arith.constant 0 : index
    %c0_12 = arith.constant 0 : index
    %25 = vector.load %arg5[%c0_10, %c0_11, %c0_12] : memref<1x4x128xf32, #tpu.memory_space<vmem>>, vector<1x4x128xf32>
    tpu.vector_store %arg5[%c0_10, %c0_11, %c0_12], %24 {strides = array<i32>} : memref<1x4x128xf32, #tpu.memory_space<vmem>>, vector<1x4x128xf32>,
    return
  }
  func.func @transform_0(%arg0: i32, %arg1: i32) -> (i32, i32, i32) {
    %c0_i32 = arith.constant 0 : i32
    %c0_i32_0 = arith.constant 0 : i32
    return %arg0, %c0_i32, %arg1 : i32, i32, i32
  }
  func.func @transform_1(%arg0: i32, %arg1: i32) -> (i32, i32) {
    %c0_i32 = arith.constant 0 : i32
    %c0_i32_0 = arith.constant 0 : i32
    %c0_i32_1 = arith.constant 0 : i32
    return %c0_i32, %c0_i32_0 : i32, i32
  }
  func.func @transform_2(%arg0: i32, %arg1: i32) -> (i32, i32) {
    %c0_i32 = arith.constant 0 : i32
    %c0_i32_0 = arith.constant 0 : i32
    %c0_i32_1 = arith.constant 0 : i32
    return %c0_i32, %c0_i32_0 : i32, i32
  }
  func.func @transform_3(%arg0: i32, %arg1: i32) -> (i32, i32, i32) {
    %c0_i32 = arith.constant 0 : i32
    %c0_i32_0 = arith.constant 0 : i32
    return %arg0, %c0_i32, %arg1 : i32, i32, i32
  }
}

</mosaic_0001>

<llo_original>
// kernel: tpu_custom_call.1
$region0: #{tpu_custom_call.1}
  #allocation0 [shape = 'u32[]', space=smem, size = 0x4, offset = 0x4, fixed_abs, tag = 'smem constant byte address 0x4 - core index']
  #allocation1 [shape = 'u32[72,128]{1,0:T(1,128)}', space=vmem, size = 0x9000, scoped, tag = 'internal scratch']
  %s0 = inlined_call_operand.hbm [shape: f32[2,4,256], index: 0, kind: input, shape index: {}]
  %s1 = inlined_call_operand.vmem [shape: f32[4,1], index: 1, kind: input, shape index: {}]
  %s2 = inlined_call_operand.vmem [shape: f32[4,1], index: 2, kind: input, shape index: {}]
  %s3 = inlined_call_operand.hbm [shape: f32[2,4,256], index: 3, kind: output, shape index: {}]
  %s4 = sld [smem:[#allocation0]]
  $region49: #{tpu_custom_call.1} parent=0
    _
  %s6 = ssub.s32 1, %s4
  %s7 = scalar_select 0, %s6, %s4
  $region1: #{tpu_custom_call.1} parent=0
    #allocation2 [shape = 'u8[4096]{0}', space=vmem, size = 0x1000, scoped, tag = 'input window, operand 0']
    #allocation3 [shape = 's32[2]{0}', space=sflag, size = 0x8, scoped, tag = 'scoped memory for tpu_custom_call.1']
    #allocation4 [shape = 's32[2]{0}', space=sflag, size = 0x8, scoped, tag = 'scoped memory for tpu_custom_call.1']
    #allocation5 [shape = 'u8[4096]{0}', space=vmem, size = 0x1000, scoped, tag = 'output window, operand 0']
    %8 = vsyncpa [#allocation3], 0
    %s9 = scalar_lea.sflag [#allocation3], 1
    %10 = vsyncpa %s9, 0
    %11 = vsyncpa [#allocation4], 0
    %s12 = scalar_lea.sflag [#allocation4], 1
    %13 = vsyncpa %s12, 0
    loop: start=0, step=1, limit=6
    $region2: #{tpu_custom_call.1} parent=1 // loop_pre_header
      _
    $region3: #{tpu_custom_call.1} parent=1 // loop_header
      %s15 = sphi 0, %s19
      %p16 = scmp.ge.s32.totalorder %s15, 6
      %s22 = sphi 0, %s34
      %s23 = sphi 0, %s30
      %s24 = sphi 0, %s22
      %s25 = sphi 0, %s23
      %s26 = sphi 0, %s24
      %s27 = sphi 0, %s25
      %s39 = sphi 0, %s41
      %s42 = sphi 0, %s39
      %s43 = sphi 0, %s42
      %s59 = sphi 0, %s43
      %s63 = sphi 0, %s63
      %s65 = sphi 0, %s63
      %s66 = sphi 0, %s65
      %s80 = sphi 0, %s66
      %s84 = sphi 0, %s84
      %s86 = sphi 0, %s84
      %s87 = sphi 0, %s86
      %s101 = sphi 0, %s87
      %s109 = sphi 0, %s111
      %s112 = sphi 0, %s109
      %s113 = sphi 0, %s112
      %s129 = sphi 0, %s113
    $region4: #{tpu_custom_call.1} parent=1 // loop_header_branch
      %18 = sbr.rel (%p16) target = $region8
    $region5: #{tpu_custom_call.1} parent=1 // loop_body
      %s20 = ssub.s32 %s15, 1
      %s21 = ssub.s32 %s15, 2
      %s28 = sadd.s32 1, %s23
      %p29 = scmp.ge.s32.totalorder %s28, 2
      %s30 = scalar_select %p29, 0, %s28
      %s31 = sadd.s32 1, %s22
      %s32 = scalar_select %p29, %s31, %s22
      %p33 = scmp.ge.s32.totalorder %s32, 2
      %s34 = scalar_select %p33, 0, %s32
      %s35 = ssub.s32 %s22, %s34
      %s36 = ssub.s32 %s23, %s30
      %s37 = sor.u32 %s35, %s36
      %p38 = scmp.eq.s32.totalorder %s37, 0
      %s40 = sadd.s32 %s39, 1
      %s41 = scalar_select %p38, %s39, %s40
      %p44 = pneg %p38
      %p45 = scmp.eq.s32.totalorder %s15, 3
      %p46 = por %p44, %p45
      %p47 = scmp.ne.s32.totalorder %s39, %s42
      %p48 = scmp.eq.s32.totalorder %s15, 0
      %p49 = por %p47, %p48
      %p50 = scmp.ne.s32.totalorder %s39, %s42
      %p51 = scmp.eq.s32.totalorder %s20, 3
      %p52 = por %p50, %p51
      %p53 = scmp.ne.s32.totalorder %s42, %s43
      %p54 = scmp.eq.s32.totalorder %s20, 0
      %p55 = por %p53, %p54
      %p56 = scmp.ne.s32.totalorder %s42, %s43
      %p57 = scmp.eq.s32.totalorder %s21, 3
      %p58 = por %p56, %p57
      %p60 = scmp.ne.s32.totalorder %s43, %s59
      %p61 = scmp.eq.s32.totalorder %s21, 0
      %p62 = por %p60, %p61
      %s64 = sadd.s32 %s63, 1
      %p67 = scmp.eq.s32.totalorder %s15, 3
      %p68 = scmp.ne.s32.totalorder %s63, %s65
      %p69 = scmp.eq.s32.totalorder %s15, 0
      %p70 = por %p68, %p69
      %p71 = scmp.ne.s32.totalorder %s63, %s65
      %p72 = scmp.eq.s32.totalorder %s20, 3
      %p73 = por %p71, %p72
      %p74 = scmp.ne.s32.totalorder %s65, %s66
      %p75 = scmp.eq.s32.totalorder %s20, 0
      %p76 = por %p74, %p75
      %p77 = scmp.ne.s32.totalorder %s65, %s66
      %p78 = scmp.eq.s32.totalorder %s21, 3
      %p79 = por %p77, %p78
      %p81 = scmp.ne.s32.totalorder %s66, %s80
      %p82 = scmp.eq.s32.totalorder %s21, 0
      %p83 = por %p81, %p82
      %s85 = sadd.s32 %s84, 1
      %p88 = scmp.eq.s32.totalorder %s15, 3
      %p89 = scmp.ne.s32.totalorder %s84, %s86
      %p90 = scmp.eq.s32.totalorder %s15, 0
      %p91 = por %p89, %p90
      %p92 = scmp.ne.s32.totalorder %s84, %s86
      %p93 = scmp.eq.s32.totalorder %s20, 3
      %p94 = por %p92, %p93
      %p95 = scmp.ne.s32.totalorder %s86, %s87
      %p96 = scmp.eq.s32.totalorder %s20, 0
      %p97 = por %p95, %p96
      %p98 = scmp.ne.s32.totalorder %s86, %s87
      %p99 = scmp.eq.s32.totalorder %s21, 3
      %p100 = por %p98, %p99
      %p102 = scmp.ne.s32.totalorder %s87, %s101
      %p103 = scmp.eq.s32.totalorder %s21, 0
      %p104 = por %p102, %p103
      %s105 = ssub.s32 %s22, %s34
      %s106 = ssub.s32 %s23, %s30
      %s107 = sor.u32 %s105, %s106
      %p108 = scmp.eq.s32.totalorder %s107, 0
      %s110 = sadd.s32 %s109, 1
      %s111 = scalar_select %p108, %s109, %s110
      %p114 = pneg %p108
      %p115 = scmp.eq.s32.totalorder %s15, 3
      %p116 = por %p114, %p115
      %p117 = scmp.ne.s32.totalorder %s109, %s112
      %p118 = scmp.eq.s32.totalorder %s15, 0
      %p119 = por %p117, %p118
      %p120 = scmp.ne.s32.totalorder %s109, %s112
      %p121 = scmp.eq.s32.totalorder %s20, 3
      %p122 = por %p120, %p121
      %p123 = scmp.ne.s32.totalorder %s112, %s113
      %p124 = scmp.eq.s32.totalorder %s20, 0
      %p125 = por %p123, %p124
      %p126 = scmp.ne.s32.totalorder %s112, %s113
      %p127 = scmp.eq.s32.totalorder %s21, 3
      %p128 = por %p126, %p127
      %p130 = scmp.ne.s32.totalorder %s113, %s129
      %p131 = scmp.eq.s32.totalorder %s21, 0
      %p132 = por %p130, %p131
      %p133 = scmp.le.s32.totalorder 1, %s15
      %p134 = scmp.lt.s32.totalorder %s15, 5
      %p135 = pnand %p133, %p134
      %p136 = pneg %p135
      // Predicated region
      $region9: #{tpu_custom_call.1} parent=5 // pred_check
        _
      $region10: #{tpu_custom_call.1} parent=5 // pred_check_branch
        %138 = sbr.rel (%p135) target = $region12
      $region11: #{tpu_custom_call.1} parent=5 // pred_region
        %s139 = ssub.s32 %s15, 1
        // Predicated region
        $region13: #{tpu_custom_call.1} parent=11 // pred_check
          %p140 = pneg %p76
        $region14: #{tpu_custom_call.1} parent=11 // pred_check_branch
          %142 = sbr.rel (%p140) target = $region16
        $region15: #{tpu_custom_call.1} parent=11 // pred_region
          _
        $region16: #{tpu_custom_call.1} parent=11 // pred_fallthru
          _
        // Predicated region
        $region17: #{tpu_custom_call.1} parent=11 // pred_check
          %p143 = pneg %p97
        $region18: #{tpu_custom_call.1} parent=11 // pred_check_branch
          %145 = sbr.rel (%p143) target = $region20
        $region19: #{tpu_custom_call.1} parent=11 // pred_region
          _
        $region20: #{tpu_custom_call.1} parent=11 // pred_fallthru
          _
      $region12: #{tpu_custom_call.1} parent=5 // pred_fallthru
        _
      %p146 = scmp.lt.s32.totalorder %s15, 4
      // Predicated region
      $region21: #{tpu_custom_call.1} parent=5 // pred_check
        %p147 = pneg %p146
      $region22: #{tpu_custom_call.1} parent=5 // pred_check_branch
        %149 = sbr.rel (%p147) target = $region24
      $region23: #{tpu_custom_call.1} parent=5 // pred_region
        // Predicated region
        $region25: #{tpu_custom_call.1} parent=23 // pred_check
          %p150 = pneg %p49
        $region26: #{tpu_custom_call.1} parent=23 // pred_check_branch
          %152 = sbr.rel (%p150) target = $region28
        $region27: #{tpu_custom_call.1} parent=23 // pred_region
          %s153 = sand.u32 %s39, 1
          %s154 = scalar_lea.sflag [#allocation3], %s153
          %s155 = sand.u32 %s39, 1
          %s156 = smul.addr %s155, 4
          %s157 = scalar_lea.vmem [#allocation2], %s156
          %159 = vsyncadd %s154, 0
          %s160 = smul.addr %s22, 2
          %s161 = sadd.s32 %s23, %s160
          %s162 = smul.addr %s161, 4
          %s163 = scalar_lea.hbm %s0, %s162
          %s165 = sshll.u32 %s163, 4
          %s166 = int_to_ptr.hbm [resolvable:$true] %s165
          %s167 = sshll.u32 %s157, 4
          %s168 = int_to_ptr.vmem [resolvable:$true] %s167
          %170 = dma.hbm_to_vmem [thread:$0]  %s166, 64, %s168, %s154
        $region28: #{tpu_custom_call.1} parent=23 // pred_fallthru
          _
      $region24: #{tpu_custom_call.1} parent=5 // pred_fallthru
        _
      %p171 = scmp.le.s32.totalorder 1, %s15
      %p172 = scmp.lt.s32.totalorder %s15, 5
      %p173 = pnand %p171, %p172
      %p174 = pneg %p173
      // Predicated region
      $region29: #{tpu_custom_call.1} parent=5 // pred_check
        _
      $region30: #{tpu_custom_call.1} parent=5 // pred_check_branch
        %176 = sbr.rel (%p173) target = $region32
      $region31: #{tpu_custom_call.1} parent=5 // pred_region
        %s177 = ssub.s32 %s15, 1
        %s178 = sand.u32 %s42, 1
        %s179 = scalar_lea.sflag [#allocation3], %s178
        %s180 = sand.u32 %s42, 1
        %s181 = smul.addr %s180, 4
        %s182 = scalar_lea.vmem [#allocation2], %s181
        // Predicated region
        $region33: #{tpu_custom_call.1} parent=31 // pred_check
          %p183 = pneg %p55
        $region34: #{tpu_custom_call.1} parent=31 // pred_check_branch
          %185 = sbr.rel (%p183) target = $region36
        $region35: #{tpu_custom_call.1} parent=31 // pred_region
          %187 = dma.done %s179, 64
        $region36: #{tpu_custom_call.1} parent=31 // pred_fallthru
          _
        %s188 = sand.u32 %s42, 1
        %s189 = scalar_lea.sflag [#allocation3], %s188
        %s190 = sand.u32 %s42, 1
        %s191 = smul.addr %s190, 4
        %s192 = scalar_lea.vmem [#allocation2], %s191
        %p193 = pneg %p55
        %p194 = pneg %p52
        %p195 = pneg %p76
        %p196 = pneg %p73
        %p197 = pneg %p97
        %p198 = pneg %p94
        %p199 = pneg %p125
        %p200 = pneg %p122
        %s201 = sand.u32 %s112, 1
        %s202 = scalar_lea.sflag [#allocation4], %s201
        %s203 = sand.u32 %s112, 1
        %s204 = smul.addr %s203, 4
        %s205 = scalar_lea.vmem [#allocation5], %s204
        %v206 = vld [vmem:[%s182] sm:$0xf]
        %vm207 = vcmask 1043456
        %v208 = vsel %vm207, %v206, 0.0
        %v209 = vrot.slane %v208, 4
        %v210 = vadd.f32 %v208, %v209
        %v211 = vrot.slane %v210, 2
        %v212 = vadd.f32 %v210, %v211
        %v213 = vrot.slane %v212, 1
        %v214 = vadd.f32 %v212, %v213
        %v215 = vrcp.pop 4.0
        %v216 = vmul.f32 4.0, %v215
        %v217 = vsub.f32 1.0, %v216
        %v218 = vmul.f32 %v215, %v217
        %v219 = vadd.f32 %v215, %v218
        %vm220 = vweird.f32 %v215
        %v221 = vsel %vm220, %v215, %v219
        %v222 = vmul.f32 %v214, %v221
        %v223 = vsub.f32 %v206, %v222
        %v224 = vmul.f32 %v223, %v223
        %v225 = vsel %vm207, %v224, 0.0
        %v226 = vrot.slane %v225, 4
        %v227 = vadd.f32 %v225, %v226
        %v228 = vrot.slane %v227, 2
        %v229 = vadd.f32 %v227, %v228
        %v230 = vrot.slane %v229, 1
        %v231 = vadd.f32 %v229, %v230
        %v232 = vmul.f32 %v231, %v221
        %v233 = vadd.f32 %v232, 1e-06
        %v234 = vrsqrt.pop %v233
        %v235 = vmul.f32 %v234, %v233
        %v236 = vmul.f32 %v235, %v234
        %v237 = vmul.f32 0.5, %v236
        %v238 = vsub.f32 1.5, %v237
        %v239 = vmul.f32 %v234, %v238
        %vm240 = vweird.f32 %v233
        %vm241 = vweird.f32 %v234
        %vm242 = vmor %vm240, %vm241
        %v243 = vsel %vm242, %v234, %v239
        %v244 = vld [vmem:[%s1] sm:$0xf]
        %v245 = vld [vmem:[%s2] sm:$0xf]
        %v246 = vmul.f32 %v223, %v243
        %248 = vset.pattern.permute.xlu0 0
        %249 = vperm.xlu0 %248, %v244
        %v250 = vpop.permute.xlu0 %249
        %v252 = vmul.f32 %v246, %v250
        %254 = vset.pattern.permute.xlu0 0
        %255 = vperm.xlu0 %254, %v245
        %v256 = vpop.permute.xlu0 %255
        %v258 = vadd.f32 %v252, %v256
        %259 = vst [vmem:[%s205] sm:$0xf] %v258
        %s260 = sand.u32 %s112, 1
        %s261 = scalar_lea.sflag [#allocation4], %s260
        %s262 = sand.u32 %s112, 1
        %s263 = smul.addr %s262, 4
        %s264 = scalar_lea.vmem [#allocation5], %s263
        // Predicated region
        $region37: #{tpu_custom_call.1} parent=31 // pred_check
          %p265 = pneg %p122
        $region38: #{tpu_custom_call.1} parent=31 // pred_check_branch
          %267 = sbr.rel (%p265) target = $region40
        $region39: #{tpu_custom_call.1} parent=31 // pred_region
          %269 = vsyncadd %s261, 0
          %s270 = smul.addr %s24, 2
          %s271 = sadd.s32 %s25, %s270
          %s272 = smul.addr %s271, 4
          %s273 = scalar_lea.hbm %s3, %s272
          %s275 = sshll.u32 %s264, 4
          %s276 = int_to_ptr.vmem [resolvable:$true] %s275
          %s277 = sshll.u32 %s273, 4
          %s278 = int_to_ptr.hbm [resolvable:$true] %s277
          %280 = dma.vmem_to_hbm [thread:$0]  %s276, 64, %s278, %s261
        $region40: #{tpu_custom_call.1} parent=31 // pred_fallthru
          _
      $region32: #{tpu_custom_call.1} parent=5 // pred_fallthru
        _
      %p281 = scmp.le.s32.totalorder 2, %s15
      // Predicated region
      $region41: #{tpu_custom_call.1} parent=5 // pred_check
        %p282 = pneg %p281
      $region42: #{tpu_custom_call.1} parent=5 // pred_check_branch
        %284 = sbr.rel (%p282) target = $region44
      $region43: #{tpu_custom_call.1} parent=5 // pred_region
        %s285 = ssub.s32 %s15, 2
        // Predicated region
        $region45: #{tpu_custom_call.1} parent=43 // pred_check
          %p286 = pneg %p128
        $region46: #{tpu_custom_call.1} parent=43 // pred_check_branch
          %288 = sbr.rel (%p286) target = $region48
        $region47: #{tpu_custom_call.1} parent=43 // pred_region
          %s289 = sand.u32 %s113, 1
          %s290 = scalar_lea.sflag [#allocation4], %s289
          %s291 = sand.u32 %s113, 1
          %s292 = smul.addr %s291, 4
          %s293 = scalar_lea.vmem [#allocation5], %s292
          %295 = dma.done %s290, 64
        $region48: #{tpu_custom_call.1} parent=43 // pred_fallthru
          _
      $region44: #{tpu_custom_call.1} parent=5 // pred_fallthru
        _
    $region6: #{tpu_custom_call.1} parent=1 // loop_footer
      %s19 = sadd.s32 1, %s15
    $region7: #{tpu_custom_call.1} parent=1 // loop_footer_branch
      %14 = sbr.rel target = $region3
    $region8: #{tpu_custom_call.1} parent=1 // loop_exit
      _
    %296 = vsyncpa [#allocation3], 1
    %s297 = scalar_lea.sflag [#allocation3], 1
    %298 = vsyncpa %s297, 1
    %299 = vsyncpa [#allocation4], 1
    %s300 = scalar_lea.sflag [#allocation4], 1
    %301 = vsyncpa %s300, 1

</llo_original>
